<compile_context>
chip_gen: v6e
topology: v6e:2x2x1
jax: 0.10.0
libtpu: 0.0.40
codegen_flags: <defaults>
</compile_context>

<pallas_src>
import math
import functools

import jax
import jax.numpy as jnp
from jax.experimental import pallas as pl
from jax.experimental.pallas import tpu as pltpu


def _mgconv_kernel(x_rows_ref, x_full_ref, wint_ref, w_ref, o_ref, acc_ref):
    """One (row-tile, scale) grid step.

    x_rows_ref : (TILE_N, Cin)   rows of x for this tile (for x @ W[0])
    x_full_ref : (N, Cin)        full x, resident (for Win^T @ x)
    wint_ref   : (1, TILE_N, N)  row slab of Win[j]^T
    w_ref      : (K, Cin, Cout)  full weight stack, resident
    o_ref      : (TILE_N, Cout)  output tile
    acc_ref    : (TILE_N, Cout)  f32 accumulator scratch
    """
    j = pl.program_id(1)

    # WWW_rows = (Win[j]^T)[rows, :] @ x : (TILE_N, N) @ (N, Cin) -> (TILE_N, Cin)
    www = jnp.dot(wint_ref[0], x_full_ref[...],
                  preferred_element_type=jnp.float32)
    # scale term: WWW_rows @ W[j+1]
    term = jnp.dot(www.astype(w_ref.dtype), w_ref[j + 1],
                   preferred_element_type=jnp.float32)

    @pl.when(j == 0)
    def _():
        # First grid step also carries the i == 0 term: x @ W[0].
        acc_ref[...] = term + jnp.dot(x_rows_ref[...], w_ref[0],
                                      preferred_element_type=jnp.float32)

    @pl.when(j > 0)
    def _():
        acc_ref[...] += term

    @pl.when(j == pl.num_programs(1) - 1)
    def _():
        # Single writeback of the output tile.
        # TODO(synk): if production Cout < 128, pad/pack Cout to a multiple of
        # 128 so this store is a lane-dense unmasked vst.
        o_ref[...] = acc_ref[...].astype(o_ref.dtype)


def _single_scale_kernel(x_ref, w_ref, o_ref):
    # Degenerate K == 1 configuration: out = x @ W[0].
    o_ref[...] = jnp.dot(x_ref[...], w_ref[0],
                         preferred_element_type=jnp.float32).astype(o_ref.dtype)


def _pick_tile_n(n, itemsize, win_budget_bytes=12 * 1024 * 1024):
    """Largest row tile whose double-buffered Win^T slab fits the budget.

    The 12 MiB budget keeps the double-buffered Win stream under ~16 MiB on
    every generation (v7x has only 64 MiB physical / 32 MiB default scoped
    VMEM). Prefers multiples of 8 that evenly divide N (no partial blocks).
    """
    max_rows = max(8, win_budget_bytes // (2 * max(n, 1) * itemsize))
    if max_rows >= n:
        return n
    cap = max(8, min(n, (max_rows // 8) * 8))
    for t in range(cap, 7, -8):
        if n % t == 0:
            return t
    return cap  # partial edge block: OOB rows are masked on the output store


@functools.partial(jax.jit, static_argnames=("compute_dtype",))
def mgconv_forward(x, win_stack, weight, compute_dtype=jnp.bfloat16):
    """MGConv forward.

    x: [N, Cin], win_stack: [K-1, N, N], weight: [K, Cin, Cout].
    Returns f32 [N, Cout]. `compute_dtype` sets the streamed dtype of
    x / Win / W (accumulation is always f32 on the MXU).
    """
    N, Cin = x.shape
    K, _, Cout = weight.shape
    assert weight.shape[1] == Cin
    out_dtype = jnp.float32

    x_c = x.astype(compute_dtype)
    w_c = weight.astype(compute_dtype)

    if K == 1:
        # NOTE: at tiny shapes XLA alone is faster; the tiled kernel below pays
        # off for N in the thousands with Cin/Cout >= 128.
        return pl.pallas_call(
            _single_scale_kernel,
            out_shape=jax.ShapeDtypeStruct((N, Cout), out_dtype),
            grid_spec=pltpu.PrefetchScalarGridSpec(
                num_scalar_prefetch=0,
                grid=(1,),
                in_specs=[
                    pl.BlockSpec((N, Cin), lambda r: (0, 0)),
                    pl.BlockSpec((K, Cin, Cout), lambda r: (0, 0, 0)),
                ],
                out_specs=pl.BlockSpec((N, Cout), lambda r: (0, 0)),
            ),
            compiler_params=pltpu.CompilerParams(
                dimension_semantics=("arbitrary",)),
        )(x_c, w_c)

    assert win_stack.shape == (K - 1, N, N)

    # Pre-transpose Win so each grid step streams a contiguous row slab of
    # Win^T and the kernel needs no in-kernel transpose.
    win_t = jnp.swapaxes(win_stack, 1, 2).astype(compute_dtype)

    itemsize = jnp.dtype(compute_dtype).itemsize
    tile_n = _pick_tile_n(N, itemsize)
    num_tiles = pl.cdiv(N, tile_n)

    # Approximate VMEM footprint (double-buffered streams + resident blocks).
    footprint = (
        2 * tile_n * N * itemsize          # Win^T row slab (double-buffered)
        + 2 * tile_n * Cin * itemsize      # x row tile
        + 2 * N * Cin * itemsize           # x (resident)
        + 2 * K * Cin * Cout * itemsize    # weight stack (resident)
        + 2 * tile_n * Cout * 4            # output tile
        + tile_n * Cout * 4                # f32 accumulator scratch
    )
    # Raise the scoped VMEM cap (v5e default is only 16 MiB); stay well under
    # v7x's 64 MiB physical per-TC VMEM.
    vmem_limit = int(min(48 * 2**20, max(32 * 2**20, 2 * footprint)))

    grid_spec = pltpu.PrefetchScalarGridSpec(
        num_scalar_prefetch=0,
        grid=(num_tiles, K - 1),           # reduction (scale) axis LAST
        in_specs=[
            pl.BlockSpec((tile_n, Cin), lambda r, j: (r, 0)),       # x rows
            pl.BlockSpec((N, Cin), lambda r, j: (0, 0)),            # x (resident)
            pl.BlockSpec((1, tile_n, N), lambda r, j: (j, r, 0)),   # Win^T slab
            pl.BlockSpec((K, Cin, Cout), lambda r, j: (0, 0, 0)),   # weights (resident)
        ],
        out_specs=pl.BlockSpec((tile_n, Cout), lambda r, j: (r, 0)),
        scratch_shapes=[pltpu.VMEM((tile_n, Cout), jnp.float32)],
    )

    return pl.pallas_call(
        _mgconv_kernel,
        out_shape=jax.ShapeDtypeStruct((N, Cout), out_dtype),
        grid_spec=grid_spec,
        compiler_params=pltpu.CompilerParams(
            dimension_semantics=("parallel", "arbitrary"),
            vmem_limit_bytes=vmem_limit,
        ),
    )(x_c, x_c, win_t, w_c)


def glorot(key, shape):
    # PyG-style glorot: uniform(-a, a), a = sqrt(6 / (fan_in + fan_out)).
    a = math.sqrt(6.0 / (shape[-2] + shape[-1]))
    return jax.random.uniform(key, shape, dtype=jnp.float32, minval=-a, maxval=a)


def mgconv_reference(x, win_stack, weight):
    out = x @ weight[0]
    for i in range(1, weight.shape[0]):
        www = win_stack[i - 1].T @ x
        out = out + www @ weight[i]
    return out


if __name__ == "__main__":
    # Small deterministic shapes consistent with the module.
    N, Cin, Cout, K = 16, 8, 16, 3

    key = jax.random.PRNGKey(0)
    k_w, k_x, k_win = jax.random.split(key, 3)

    # Parameters (deterministic init mirroring reset_parameters).
    weight = glorot(k_w, (K, Cin, Cout))
    bias = jnp.ones((Cout,), jnp.float32)  # allocated but unused in forward()

    # Inputs.
    x = jax.random.normal(k_x, (N, Cin), dtype=jnp.float32)
    win_stack = jax.random.normal(k_win, (K - 1, N, N), dtype=jnp.float32)

    ref = mgconv_reference(x, win_stack, weight)

    # Strict check: f32 compute path.
    out_f32 = jax.block_until_ready(
        mgconv_forward(x, win_stack, weight, compute_dtype=jnp.float32))
    assert out_f32.shape == (N, Cout)
    assert jnp.allclose(out_f32, ref, atol=1e-3, rtol=1e-3), "f32 mismatch vs reference"

    # Fast path: bf16 streams with f32 accumulation (loose tolerance accounts
    # for bf16 input rounding; accumulation stays in f32 on the MXU).
    out_bf16 = jax.block_until_ready(
        mgconv_forward(x, win_stack, weight, compute_dtype=jnp.bfloat16))
    assert out_bf16.shape == (N, Cout)
    assert jnp.allclose(out_bf16, ref, atol=0.5, rtol=0.05), "bf16 mismatch vs reference"

    print("KERNEL_OK")
</pallas_src>

<mosaic_0001>
module attributes {stable_mosaic.version = 11 : i64} {
  func.func @_mgconv_kernel(%arg0: i32, %arg1: i32, %arg2: memref<16x8xf32, #tpu.memory_space<vmem>>, %arg3: memref<16x8xf32, #tpu.memory_space<vmem>>, %arg4: memref<1x16x16xf32, #tpu.memory_space<vmem>>, %arg5: memref<3x8x16xf32, #tpu.memory_space<vmem>>, %arg6: memref<16x16xf32, #tpu.memory_space<vmem>>, %arg7: memref<16x16xf32, #tpu.memory_space<vmem>>) attributes {dimension_semantics = [#tpu.dimension_semantics<parallel>, #tpu.dimension_semantics<arbitrary>], iteration_bounds = array<i64: 1, 2>, scalar_prefetch = 0 : i64, scratch_operands = 1 : i64, tpu.core_type = #tpu.core_type<tc>, window_params = [{transform_indices = @transform_0, window_bounds = array<i64: 16, 8>}, {pipeline_mode = #tpu.pipeline_mode<synchronous>, transform_indices = @transform_1, window_bounds = array<i64: 16, 8>}, {transform_indices = @transform_2, window_bounds = array<i64: 1, 16, 16>}, {pipeline_mode = #tpu.pipeline_mode<synchronous>, transform_indices = @transform_3, window_bounds = array<i64: 3, 8, 16>}, {transform_indices = @transform_4, window_bounds = array<i64: 16, 16>}]} {
    %c0 = arith.constant 0 : index
    %c0_0 = arith.constant 0 : index
    %c0_1 = arith.constant 0 : index
    %0 = vector.load %arg4[%c0, %c0_0, %c0_1] : memref<1x16x16xf32, #tpu.memory_space<vmem>>, vector<1x16x16xf32>
    %1 = vector.shape_cast %0 : vector<1x16x16xf32> to vector<16x16xf32>
    %c0_2 = arith.constant 0 : index
    %c0_3 = arith.constant 0 : index
    %2 = vector.load %arg3[%c0_2, %c0_3] : memref<16x8xf32, #tpu.memory_space<vmem>>, vector<16x8xf32>
    %cst = arith.constant dense<0.000000e+00> : vector<16x8xf32>
    %3 = tpu.matmul %1, %2, %cst {dimension_numbers = #tpu.dot_dimension_numbers<[1], [0], [0], [1], [0, 0, 1, 1], [], []>} : vector<16x16xf32>, vector<16x8xf32>, vector<16x8xf32> -> vector<16x8xf32>
    %c1_i32 = arith.constant 1 : i32
    %4 = arith.addi %arg1, %c1_i32 : i32
    %5 = arith.index_cast %4 : i32 to index
    %c0_4 = arith.constant 0 : index
    %c0_5 = arith.constant 0 : index
    %6 = vector.load %arg5[%5, %c0_4, %c0_5] : memref<3x8x16xf32, #tpu.memory_space<vmem>>, vector<1x8x16xf32>
    %7 = vector.shape_cast %6 : vector<1x8x16xf32> to vector<8x16xf32>
    %cst_6 = arith.constant dense<0.000000e+00> : vector<16x16xf32>
    %8 = tpu.matmul %3, %7, %cst_6 {dimension_numbers = #tpu.dot_dimension_numbers<[1], [0], [0], [1], [0, 0, 1, 1], [], []>} : vector<16x8xf32>, vector<8x16xf32>, vector<16x16xf32> -> vector<16x16xf32>
    %c0_i32 = arith.constant 0 : i32
    %9 = arith.cmpi eq, %arg1, %c0_i32 : i32
    %10 = arith.extui %9 : i1 to i32
    %c0_i32_7 = arith.constant 0 : i32
    %11 = arith.cmpi ne, %10, %c0_i32_7 : i32
    scf.if %11 {
      %c0_12 = arith.constant 0 : index
      %c0_13 = arith.constant 0 : index
      %18 = vector.load %arg2[%c0_12, %c0_13] : memref<16x8xf32, #tpu.memory_space<vmem>>, vector<16x8xf32>
      %c0_14 = arith.constant 0 : index
      %c0_15 = arith.constant 0 : index
      %c0_16 = arith.constant 0 : index
      %19 = vector.load %arg5[%c0_14, %c0_15, %c0_16] : memref<3x8x16xf32, #tpu.memory_space<vmem>>, vector<1x8x16xf32>
      %20 = vector.shape_cast %19 : vector<1x8x16xf32> to vector<8x16xf32>
      %cst_17 = arith.constant dense<0.000000e+00> : vector<16x16xf32>
      %21 = tpu.matmul %18, %20, %cst_17 {dimension_numbers = #tpu.dot_dimension_numbers<[1], [0], [0], [1], [0, 0, 1, 1], [], []>} : vector<16x8xf32>, vector<8x16xf32>, vector<16x16xf32> -> vector<16x16xf32>
      %22 = arith.addf %8, %21 : vector<16x16xf32>
      %c0_18 = arith.constant 0 : index
      %c0_19 = arith.constant 0 : index
      %23 = vector.load %arg7[%c0_18, %c0_19] : memref<16x16xf32, #tpu.memory_space<vmem>>, vector<16x16xf32>
      tpu.vector_store %arg7[%c0_18, %c0_19], %22 {strides = array<i32>} : memref<16x16xf32, #tpu.memory_space<vmem>>, vector<16x16xf32>,
    } else {
    }
    %c0_i32_8 = arith.constant 0 : i32
    %12 = arith.cmpi sgt, %arg1, %c0_i32_8 : i32
    %13 = arith.extui %12 : i1 to i32
    %c0_i32_9 = arith.constant 0 : i32
    %14 = arith.cmpi ne, %13, %c0_i32_9 : i32
    scf.if %14 {
      %c0_12 = arith.constant 0 : index
      %c0_13 = arith.constant 0 : index
      %18 = vector.load %arg7[%c0_12, %c0_13] : memref<16x16xf32, #tpu.memory_space<vmem>>, vector<16x16xf32>
      %19 = arith.addf %18, %8 : vector<16x16xf32>
      %c0_14 = arith.constant 0 : index
      %c0_15 = arith.constant 0 : index
      %20 = vector.load %arg7[%c0_14, %c0_15] : memref<16x16xf32, #tpu.memory_space<vmem>>, vector<16x16xf32>
      tpu.vector_store %arg7[%c0_14, %c0_15], %19 {strides = array<i32>} : memref<16x16xf32, #tpu.memory_space<vmem>>, vector<16x16xf32>,
    } else {
    }
    %c1_i32_10 = arith.constant 1 : i32
    %15 = arith.cmpi eq, %arg1, %c1_i32_10 : i32
    %16 = arith.extui %15 : i1 to i32
    %c0_i32_11 = arith.constant 0 : i32
    %17 = arith.cmpi ne, %16, %c0_i32_11 : i32
    scf.if %17 {
      %c0_12 = arith.constant 0 : index
      %c0_13 = arith.constant 0 : index
      %18 = vector.load %arg7[%c0_12, %c0_13] : memref<16x16xf32, #tpu.memory_space<vmem>>, vector<16x16xf32>
      %c0_14 = arith.constant 0 : index
      %c0_15 = arith.constant 0 : index
      %19 = vector.load %arg6[%c0_14, %c0_15] : memref<16x16xf32, #tpu.memory_space<vmem>>, vector<16x16xf32>
      tpu.vector_store %arg6[%c0_14, %c0_15], %18 {strides = array<i32>} : memref<16x16xf32, #tpu.memory_space<vmem>>, vector<16x16xf32>,
    } else {
    }
    return
  }
  func.func @transform_0(%arg0: i32, %arg1: i32) -> (i32, i32) {
    %c0_i32 = arith.constant 0 : i32
    %c0_i32_0 = arith.constant 0 : i32
    return %arg0, %c0_i32 : i32, i32
  }
  func.func @transform_1(%arg0: i32, %arg1: i32) -> (i32, i32) {
    %c0_i32 = arith.constant 0 : i32
    %c0_i32_0 = arith.constant 0 : i32
    %c0_i32_1 = arith.constant 0 : i32
    return %c0_i32, %c0_i32_0 : i32, i32
  }
  func.func @transform_2(%arg0: i32, %arg1: i32) -> (i32, i32, i32) {
    %c0_i32 = arith.constant 0 : i32
    %c0_i32_0 = arith.constant 0 : i32
    return %arg1, %arg0, %c0_i32 : i32, i32, i32
  }
  func.func @transform_3(%arg0: i32, %arg1: i32) -> (i32, i32, i32) {
    %c0_i32 = arith.constant 0 : i32
    %c0_i32_0 = arith.constant 0 : i32
    %c0_i32_1 = arith.constant 0 : i32
    %c0_i32_2 = arith.constant 0 : i32
    return %c0_i32, %c0_i32_0, %c0_i32_1 : i32, i32, i32
  }
  func.func @transform_4(%arg0: i32, %arg1: i32) -> (i32, i32) {
    %c0_i32 = arith.constant 0 : i32
    %c0_i32_0 = arith.constant 0 : i32
    return %arg0, %c0_i32 : i32, i32
  }
}

</mosaic_0001>

<llo_original>
// kernel: mgconv_forward.1
$region0: #{mgconv_forward.1}
  #allocation0 [shape = 'u32[]', space=smem, size = 0x4, offset = 0x4, fixed_abs, tag = 'smem constant byte address 0x4 - core index']
  #allocation1 [shape = 'u32[144,128]{1,0:T(1,128)}', space=vmem, size = 0x12000, scoped, tag = 'internal scratch']
  #allocation2 [shape = 'f32[16,16]{1,0:T(8,128)}', space=vmem, size = 0x2000, scoped, tag = 'scratch operand']
  %s0 = inlined_call_operand.vmem [shape: f32[16,8], index: 0, kind: input, shape index: {}, may-alias: {0,1}]
  %s1 = inlined_call_operand.vmem [shape: f32[16,8], index: 1, kind: input, shape index: {}, may-alias: {0,1}]
  %s2 = inlined_call_operand.vmem [shape: f32[2,16,16], index: 2, kind: input, shape index: {}]
  %s3 = inlined_call_operand.vmem [shape: f32[3,8,16], index: 3, kind: input, shape index: {}]
  %s4 = inlined_call_operand.hbm [shape: f32[16,16], index: 4, kind: output, shape index: {}]
  %s5 = sld [smem:[#allocation0]]
  $region61: #{mgconv_forward.1} parent=0
    _
  %s7 = ssub.s32 1, %s5
  %s8 = scalar_select 0, %s7, %s5
  $region1: #{mgconv_forward.1} parent=0
    #allocation3 [shape = 'u8[8192]{0}', space=vmem, size = 0x2000, scoped, tag = 'output window, operand 0, single buffered']
    #allocation4 [shape = 's32[2]{0}', space=sflag, size = 0x8, scoped, tag = 'scoped memory for mgconv_forward.1']
    %9 = vsyncpa [#allocation4], 0
    loop: start=0, step=1, limit=4
    $region2: #{mgconv_forward.1} parent=1 // loop_pre_header
      _
    $region3: #{mgconv_forward.1} parent=1 // loop_header
      %s11 = sphi 0, %s15
      %p12 = scmp.ge.s32.totalorder %s11, 4
      %s18 = sphi 0, %s30
      %s19 = sphi 0, %s26
      %s20 = sphi 0, %s18
      %s21 = sphi 0, %s19
      %s22 = sphi 0, %s20
      %s23 = sphi 0, %s21
      %s33 = sphi 0, %s35
      %s36 = sphi 0, %s33
      %s37 = sphi 0, %s36
      %s53 = sphi 0, %s37
      %s57 = sphi 0, %s57
      %s59 = sphi 0, %s57
      %s60 = sphi 0, %s59
      %s74 = sphi 0, %s60
      %s82 = sphi 0, %s84
      %s85 = sphi 0, %s82
      %s86 = sphi 0, %s85
      %s102 = sphi 0, %s86
      %s106 = sphi 0, %s106
      %s108 = sphi 0, %s106
      %s109 = sphi 0, %s108
      %s123 = sphi 0, %s109
      %s129 = sphi 0, %s131
      %s132 = sphi 0, %s129
      %s133 = sphi 0, %s132
      %s149 = sphi 0, %s133
    $region4: #{mgconv_forward.1} parent=1 // loop_header_branch
      %14 = sbr.rel (%p12) target = $region8
    $region5: #{mgconv_forward.1} parent=1 // loop_body
      %s16 = ssub.s32 %s11, 1
      %s17 = ssub.s32 %s11, 2
      %s24 = sadd.s32 1, %s19
      %p25 = scmp.ge.s32.totalorder %s24, 2
      %s26 = scalar_select %p25, 0, %s24
      %s27 = sadd.s32 1, %s18
      %s28 = scalar_select %p25, %s27, %s18
      %p29 = scmp.ge.s32.totalorder %s28, 1
      %s30 = scalar_select %p29, 0, %s28
      %s31 = ssub.s32 %s18, %s30
      %p32 = scmp.eq.s32.totalorder %s31, 0
      %s34 = sadd.s32 %s33, 1
      %s35 = scalar_select %p32, %s33, %s34
      %p38 = pneg %p32
      %p39 = scmp.eq.s32.totalorder %s11, 1
      %p40 = por %p38, %p39
      %p41 = scmp.ne.s32.totalorder %s33, %s36
      %p42 = scmp.eq.s32.totalorder %s11, 0
      %p43 = por %p41, %p42
      %p44 = scmp.ne.s32.totalorder %s33, %s36
      %p45 = scmp.eq.s32.totalorder %s16, 1
      %p46 = por %p44, %p45
      %p47 = scmp.ne.s32.totalorder %s36, %s37
      %p48 = scmp.eq.s32.totalorder %s16, 0
      %p49 = por %p47, %p48
      %p50 = scmp.ne.s32.totalorder %s36, %s37
      %p51 = scmp.eq.s32.totalorder %s17, 1
      %p52 = por %p50, %p51
      %p54 = scmp.ne.s32.totalorder %s37, %s53
      %p55 = scmp.eq.s32.totalorder %s17, 0
      %p56 = por %p54, %p55
      %s58 = sadd.s32 %s57, 1
      %p61 = scmp.eq.s32.totalorder %s11, 1
      %p62 = scmp.ne.s32.totalorder %s57, %s59
      %p63 = scmp.eq.s32.totalorder %s11, 0
      %p64 = por %p62, %p63
      %p65 = scmp.ne.s32.totalorder %s57, %s59
      %p66 = scmp.eq.s32.totalorder %s16, 1
      %p67 = por %p65, %p66
      %p68 = scmp.ne.s32.totalorder %s59, %s60
      %p69 = scmp.eq.s32.totalorder %s16, 0
      %p70 = por %p68, %p69
      %p71 = scmp.ne.s32.totalorder %s59, %s60
      %p72 = scmp.eq.s32.totalorder %s17, 1
      %p73 = por %p71, %p72
      %p75 = scmp.ne.s32.totalorder %s60, %s74
      %p76 = scmp.eq.s32.totalorder %s17, 0
      %p77 = por %p75, %p76
      %s78 = ssub.s32 %s19, %s26
      %s79 = ssub.s32 %s18, %s30
      %s80 = sor.u32 %s78, %s79
      %p81 = scmp.eq.s32.totalorder %s80, 0
      %s83 = sadd.s32 %s82, 1
      %s84 = scalar_select %p81, %s82, %s83
      %p87 = pneg %p81
      %p88 = scmp.eq.s32.totalorder %s11, 1
      %p89 = por %p87, %p88
      %p90 = scmp.ne.s32.totalorder %s82, %s85
      %p91 = scmp.eq.s32.totalorder %s11, 0
      %p92 = por %p90, %p91
      %p93 = scmp.ne.s32.totalorder %s82, %s85
      %p94 = scmp.eq.s32.totalorder %s16, 1
      %p95 = por %p93, %p94
      %p96 = scmp.ne.s32.totalorder %s85, %s86
      %p97 = scmp.eq.s32.totalorder %s16, 0
      %p98 = por %p96, %p97
      %p99 = scmp.ne.s32.totalorder %s85, %s86
      %p100 = scmp.eq.s32.totalorder %s17, 1
      %p101 = por %p99, %p100
      %p103 = scmp.ne.s32.totalorder %s86, %s102
      %p104 = scmp.eq.s32.totalorder %s17, 0
      %p105 = por %p103, %p104
      %s107 = sadd.s32 %s106, 1
      %p110 = scmp.eq.s32.totalorder %s11, 1
      %p111 = scmp.ne.s32.totalorder %s106, %s108
      %p112 = scmp.eq.s32.totalorder %s11, 0
      %p113 = por %p111, %p112
      %p114 = scmp.ne.s32.totalorder %s106, %s108
      %p115 = scmp.eq.s32.totalorder %s16, 1
      %p116 = por %p114, %p115
      %p117 = scmp.ne.s32.totalorder %s108, %s109
      %p118 = scmp.eq.s32.totalorder %s16, 0
      %p119 = por %p117, %p118
      %p120 = scmp.ne.s32.totalorder %s108, %s109
      %p121 = scmp.eq.s32.totalorder %s17, 1
      %p122 = por %p120, %p121
      %p124 = scmp.ne.s32.totalorder %s109, %s123
      %p125 = scmp.eq.s32.totalorder %s17, 0
      %p126 = por %p124, %p125
      %s127 = ssub.s32 %s18, %s30
      %p128 = scmp.eq.s32.totalorder %s127, 0
      %s130 = sadd.s32 %s129, 1
      %s131 = scalar_select %p128, %s129, %s130
      %p134 = pneg %p128
      %p135 = scmp.eq.s32.totalorder %s11, 1
      %p136 = por %p134, %p135
      %p137 = scmp.ne.s32.totalorder %s129, %s132
      %p138 = scmp.eq.s32.totalorder %s11, 0
      %p139 = por %p137, %p138
      %p140 = scmp.ne.s32.totalorder %s129, %s132
      %p141 = scmp.eq.s32.totalorder %s16, 1
      %p142 = por %p140, %p141
      %p143 = scmp.ne.s32.totalorder %s132, %s133
      %p144 = scmp.eq.s32.totalorder %s16, 0
      %p145 = por %p143, %p144
      %p146 = scmp.ne.s32.totalorder %s132, %s133
      %p147 = scmp.eq.s32.totalorder %s17, 1
      %p148 = por %p146, %p147
      %p150 = scmp.ne.s32.totalorder %s133, %s149
      %p151 = scmp.eq.s32.totalorder %s17, 0
      %p152 = por %p150, %p151
      %p153 = scmp.le.s32.totalorder 1, %s11
      %p154 = scmp.lt.s32.totalorder %s11, 3
      %p155 = pnand %p153, %p154
      %p156 = pneg %p155
      // Predicated region
      $region9: #{mgconv_forward.1} parent=5 // pred_check
        _
      $region10: #{mgconv_forward.1} parent=5 // pred_check_branch
        %158 = sbr.rel (%p155) target = $region12
      $region11: #{mgconv_forward.1} parent=5 // pred_region
        %s159 = ssub.s32 %s11, 1
        // Predicated region
        $region13: #{mgconv_forward.1} parent=11 // pred_check
          %p160 = pneg %p49
        $region14: #{mgconv_forward.1} parent=11 // pred_check_branch
          %162 = sbr.rel (%p160) target = $region16
        $region15: #{mgconv_forward.1} parent=11 // pred_region
          %s163 = smul.u32 2, %s20
          %p164 = scmp.lt.s32.totalorder %s163, 1
          %s165 = scalar_select %p164, %s163, 1
          %s166 = smul.addr %s165, 8
          %s167 = scalar_lea.vmem %s0, %s166
          %s168 = smul.u32 2, %s20
        $region16: #{mgconv_forward.1} parent=11 // pred_fallthru
          _
        // Predicated region
        $region17: #{mgconv_forward.1} parent=11 // pred_check
          %p169 = pneg %p70
        $region18: #{mgconv_forward.1} parent=11 // pred_check_branch
          %171 = sbr.rel (%p169) target = $region20
        $region19: #{mgconv_forward.1} parent=11 // pred_region
          _
        $region20: #{mgconv_forward.1} parent=11 // pred_fallthru
          _
        // Predicated region
        $region21: #{mgconv_forward.1} parent=11 // pred_check
          %p172 = pneg %p119
        $region22: #{mgconv_forward.1} parent=11 // pred_check_branch
          %174 = sbr.rel (%p172) target = $region24
        $region23: #{mgconv_forward.1} parent=11 // pred_region
          _
        $region24: #{mgconv_forward.1} parent=11 // pred_fallthru
          _
      $region12: #{mgconv_forward.1} parent=5 // pred_fallthru
        _
      %p175 = scmp.lt.s32.totalorder %s11, 2
      // Predicated region
      $region25: #{mgconv_forward.1} parent=5 // pred_check
        %p176 = pneg %p175
      $region26: #{mgconv_forward.1} parent=5 // pred_check_branch
        %178 = sbr.rel (%p176) target = $region28
      $region27: #{mgconv_forward.1} parent=5 // pred_region
        // Predicated region
        $region29: #{mgconv_forward.1} parent=27 // pred_check
          %p179 = pneg %p92
        $region30: #{mgconv_forward.1} parent=27 // pred_check_branch
          %181 = sbr.rel (%p179) target = $region32
        $region31: #{mgconv_forward.1} parent=27 // pred_region
          %s182 = smul.u32 2, %s18
          %p183 = scmp.lt.s32.totalorder %s19, 1
          %s184 = scalar_select %p183, %s19, 1
          %p185 = scmp.lt.s32.totalorder %s182, 1
          %s186 = scalar_select %p185, %s182, 1
          %s187 = smul.addr %s184, 2
          %s188 = sadd.s32 %s186, %s187
          %s189 = smul.addr %s188, 8
          %s190 = scalar_lea.vmem %s2, %s189
          %s191 = smul.u32 2, %s18
        $region32: #{mgconv_forward.1} parent=27 // pred_fallthru
          _
      $region28: #{mgconv_forward.1} parent=5 // pred_fallthru
        _
      %p192 = scmp.le.s32.totalorder 1, %s11
      %p193 = scmp.lt.s32.totalorder %s11, 3
      %p194 = pnand %p192, %p193
      %p195 = pneg %p194
      // Predicated region
      $region33: #{mgconv_forward.1} parent=5 // pred_check
        _
      $region34: #{mgconv_forward.1} parent=5 // pred_check_branch
        %197 = sbr.rel (%p194) target = $region36
      $region35: #{mgconv_forward.1} parent=5 // pred_region
        %s198 = ssub.s32 %s11, 1
        %s199 = smul.u32 2, %s20
        %p200 = scmp.lt.s32.totalorder %s199, 1
        %s201 = scalar_select %p200, %s199, 1
        %s202 = smul.addr %s201, 8
        %s203 = scalar_lea.vmem %s0, %s202
        %p204 = pneg %p49
        %p205 = pneg %p46
        %p206 = pneg %p70
        %p207 = pneg %p67
        %s208 = smul.u32 2, %s20
        %p209 = scmp.lt.s32.totalorder %s21, 1
        %s210 = scalar_select %p209, %s21, 1
        %p211 = scmp.lt.s32.totalorder %s208, 1
        %s212 = scalar_select %p211, %s208, 1
        %s213 = smul.addr %s210, 2
        %s214 = sadd.s32 %s212, %s213
        %s215 = smul.addr %s214, 8
        %s216 = scalar_lea.vmem %s2, %s215
        %p217 = pneg %p98
        %p218 = pneg %p95
        %p219 = pneg %p119
        %p220 = pneg %p116
        %p221 = pneg %p145
        %p222 = pneg %p142
        %s223 = smul.u32 2, %s20
        %p224 = scmp.lt.s32.totalorder %s223, 1
        %s225 = scalar_select %p224, %s223, 1
        %s226 = smul.addr %s225, 8
        %s227 = scalar_lea.vmem %s0, %s226
        %s228 = smul.u32 2, %s20
        %s229 = smul.u32 2, %s20
        %p230 = scmp.lt.s32.totalorder %s21, 1
        %s231 = scalar_select %p230, %s21, 1
        %p232 = scmp.lt.s32.totalorder %s229, 1
        %s233 = scalar_select %p232, %s229, 1
        %s234 = smul.addr %s231, 2
        %s235 = sadd.s32 %s233, %s234
        %s236 = smul.addr %s235, 8
        %s237 = scalar_lea.vmem %s2, %s236
        %s238 = smul.u32 2, %s20
        %s239 = smul.u32 2, %s20
        %v240 = vld [vmem:[%s237] sm:$0xff]
        %v241 = vld [vmem:[%s237 + $0x8] sm:$0xff]
        %v242 = vld [vmem:[%s1] sm:$0xff]
        %v243 = vld [vmem:[%s1 + $0x8] sm:$0xff]
        %vm244 = vcmask 130048
        %v246 = vsel %vm244, %v240, 0
        %v249 = vsel %vm244, %v241, 0
        %251 = vmatprep.subr.mxu0 0.0
        %252 = vmatpush1.msra.mxu0 0.0
        %253 = vmatprep.subr.mxu0 0.0
        %254 = vmatpush1.msra.mxu0 0.0
        %255 = vmatprep.subr.mxu0 0.0
        %256 = vmatpush1.msra.mxu0 0.0
        %257 = vmatprep.subr.mxu0 0.0
        %258 = vmatpush1.msra.mxu0 0.0
        %259 = vmatprep.subr.mxu0 0.0
        %260 = vmatpush1.msra.mxu0 0.0
        %261 = vmatprep.subr.mxu0 0.0
        %262 = vmatpush1.msra.mxu0 0.0
        %263 = vmatprep.subr.mxu0 0.0
        %264 = vmatpush1.msra.mxu0 0.0
        %265 = vmatprep.subr.mxu0 0.0
        %266 = vmatpush1.msra.mxu0 0.0
        %267 = vmatprep.subr.mxu0 0.0
        %268 = vmatpush1.msra.mxu0 0.0
        %269 = vmatprep.subr.mxu0 0.0
        %270 = vmatpush1.msra.mxu0 0.0
        %271 = vmatprep.subr.mxu0 0.0
        %272 = vmatpush1.msra.mxu0 0.0
        %273 = vmatprep.subr.mxu0 0.0
        %274 = vmatpush1.msra.mxu0 0.0
        %275 = vmatprep.subr.mxu0 0.0
        %276 = vmatpush1.msra.mxu0 0.0
        %277 = vmatprep.subr.mxu0 0.0
        %278 = vmatpush1.msra.mxu0 0.0
        %279 = vmatprep.subr.mxu0 0.0
        %280 = vmatpush1.msra.mxu0 %v243
        %281 = vmatprep.subr.mxu0 0.0
        %282 = vmatpush1.msra.mxu0 %v242
        %283 = vmatprep.subr.mxu0 0.0
        %284 = vmatpush2.msra.mxu0 0.0
        %285 = vmatprep.subr.mxu0 0.0
        %286 = vmatpush2.msra.mxu0 0.0
        %287 = vmatprep.subr.mxu0 0.0
        %288 = vmatpush2.msra.mxu0 0.0
        %289 = vmatprep.subr.mxu0 0.0
        %290 = vmatpush2.msra.mxu0 0.0
        %291 = vmatprep.subr.mxu0 0.0
        %292 = vmatpush2.msra.mxu0 0.0
        %293 = vmatprep.subr.mxu0 0.0
        %294 = vmatpush2.msra.mxu0 0.0
        %295 = vmatprep.subr.mxu0 0.0
        %296 = vmatpush2.msra.mxu0 0.0
        %297 = vmatprep.subr.mxu0 0.0
        %298 = vmatpush2.msra.mxu0 0.0
        %299 = vmatprep.subr.mxu0 0.0
        %300 = vmatpush2.msra.mxu0 0.0
        %301 = vmatprep.subr.mxu0 0.0
        %302 = vmatpush2.msra.mxu0 0.0
        %303 = vmatprep.subr.mxu0 0.0
        %304 = vmatpush2.msra.mxu0 0.0
        %305 = vmatprep.subr.mxu0 0.0
        %306 = vmatpush2.msra.mxu0 0.0
        %307 = vmatprep.subr.mxu0 0.0
        %308 = vmatpush2.msra.mxu0 0.0
        %309 = vmatprep.subr.mxu0 0.0
        %310 = vmatpush2.msra.mxu0 0.0
        %311 = vmatprep.subr.mxu0 0.0
        %312 = vmatpush2.msra.mxu0 0.0
        %313 = vmatprep.subr.mxu0 0.0
        %314 = vmatpush2.msra.mxu0 0.0
        %315 = vmatprep.mubr.f32.mxu0 0.0
        %316 = vmatmul.mubr.f32.gmra.mxu0 %v246
        %v317 = vpop.f32.mrf.mxu0
        %v318 = vadd.f32 0.0, %v317
        %v319 = vpop.f32.mrf.mxu0
        %320 = vmatprep.mubr.f32.mxu0 0.0
        %321 = vmatmul.mubr.f32.gmra.mxu0 %v249
        %v322 = vpop.f32.mrf.mxu0
        %v323 = vadd.f32 0.0, %v322
        %v324 = vpop.f32.mrf.mxu0
        %325 = vdwg.mxu0
        %s326 = sadd.s32 %s21, 1
        %s327 = smul.u32 %s326, 8
        %s328 = scalar_lea.vmem %s3, %s327
        %v329 = vld [vmem:[%s328] sm:$0xff]
        %vm330 = vcmask 64512
        %v332 = vsel %vm330, %v318, 0
        %v335 = vsel %vm330, %v323, 0
        %337 = vmatprep.subr.mxu0 0.0
        %338 = vmatpush1.msra.mxu0 0.0
        %339 = vmatprep.subr.mxu0 0.0
        %340 = vmatpush1.msra.mxu0 0.0
        %341 = vmatprep.subr.mxu0 0.0
        %342 = vmatpush1.msra.mxu0 0.0
        %343 = vmatprep.subr.mxu0 0.0
        %344 = vmatpush1.msra.mxu0 0.0
        %345 = vmatprep.subr.mxu0 0.0
        %346 = vmatpush1.msra.mxu0 0.0
        %347 = vmatprep.subr.mxu0 0.0
        %348 = vmatpush1.msra.mxu0 0.0
        %349 = vmatprep.subr.mxu0 0.0
        %350 = vmatpush1.msra.mxu0 0.0
        %351 = vmatprep.subr.mxu0 0.0
        %352 = vmatpush1.msra.mxu0 0.0
        %353 = vmatprep.subr.mxu0 0.0
        %354 = vmatpush1.msra.mxu0 0.0
        %355 = vmatprep.subr.mxu0 0.0
        %356 = vmatpush1.msra.mxu0 0.0
        %357 = vmatprep.subr.mxu0 0.0
        %358 = vmatpush1.msra.mxu0 0.0
        %359 = vmatprep.subr.mxu0 0.0
        %360 = vmatpush1.msra.mxu0 0.0
        %361 = vmatprep.subr.mxu0 0.0
        %362 = vmatpush1.msra.mxu0 0.0
        %363 = vmatprep.subr.mxu0 0.0
        %364 = vmatpush1.msra.mxu0 0.0
        %365 = vmatprep.subr.mxu0 0.0
        %366 = vmatpush1.msra.mxu0 0.0
        %367 = vmatprep.subr.mxu0 0.0
        %368 = vmatpush1.msra.mxu0 %v329
        %369 = vmatprep.subr.mxu0 0.0
        %370 = vmatpush2.msra.mxu0 0.0
        %371 = vmatprep.subr.mxu0 0.0
        %372 = vmatpush2.msra.mxu0 0.0
        %373 = vmatprep.subr.mxu0 0.0
        %374 = vmatpush2.msra.mxu0 0.0
        %375 = vmatprep.subr.mxu0 0.0
        %376 = vmatpush2.msra.mxu0 0.0
        %377 = vmatprep.subr.mxu0 0.0
        %378 = vmatpush2.msra.mxu0 0.0
        %379 = vmatprep.subr.mxu0 0.0
        %380 = vmatpush2.msra.mxu0 0.0
        %381 = vmatprep.subr.mxu0 0.0
        %382 = vmatpush2.msra.mxu0 0.0
        %383 = vmatprep.subr.mxu0 0.0
        %384 = vmatpush2.msra.mxu0 0.0
        %385 = vmatprep.subr.mxu0 0.0
        %386 = vmatpush2.msra.mxu0 0.0
        %387 = vmatprep.subr.mxu0 0.0
        %388 = vmatpush2.msra.mxu0 0.0
        %389 = vmatprep.subr.mxu0 0.0
        %390 = vmatpush2.msra.mxu0 0.0
        %391 = vmatprep.subr.mxu0 0.0
        %392 = vmatpush2.msra.mxu0 0.0
        %393 = vmatprep.subr.mxu0 0.0
        %394 = vmatpush2.msra.mxu0 0.0
        %395 = vmatprep.subr.mxu0 0.0
        %396 = vmatpush2.msra.mxu0 0.0
        %397 = vmatprep.subr.mxu0 0.0
        %398 = vmatpush2.msra.mxu0 0.0
        %399 = vmatprep.subr.mxu0 0.0
        %400 = vmatpush2.msra.mxu0 0.0
        %401 = vmatprep.mubr.f32.mxu0 0.0
        %402 = vmatmul.mubr.f32.gmra.mxu0 %v332
        %v403 = vpop.f32.mrf.mxu0
        %v404 = vadd.f32 0.0, %v403
        %v405 = vpop.f32.mrf.mxu0
        %406 = vmatprep.mubr.f32.mxu0 0.0
        %407 = vmatmul.mubr.f32.gmra.mxu0 %v335
        %v408 = vpop.f32.mrf.mxu0
        %v409 = vadd.f32 0.0, %v408
        %v410 = vpop.f32.mrf.mxu0
        %411 = vdwg.mxu0
        %p412 = scmp.eq.s32.totalorder %s21, 0
        // Predicated region
        $region37: #{mgconv_forward.1} parent=35 // pred_check
          %p413 = pneg %p412
        $region38: #{mgconv_forward.1} parent=35 // pred_check_branch
          %415 = sbr.rel (%p413) target = $region40
        $region39: #{mgconv_forward.1} parent=35 // pred_region
          %v416 = vld [vmem:[%s227] sm:$0xff]
          %v417 = vld [vmem:[%s227 + $0x8] sm:$0xff]
          %v418 = vld [vmem:[%s3] sm:$0xff]
          %v420 = vsel %vm330, %v416, 0
          %v423 = vsel %vm330, %v417, 0
          %425 = vmatprep.subr.mxu0 0.0
          %426 = vmatpush1.msra.mxu0 0.0
          %427 = vmatprep.subr.mxu0 0.0
          %428 = vmatpush1.msra.mxu0 0.0
          %429 = vmatprep.subr.mxu0 0.0
          %430 = vmatpush1.msra.mxu0 0.0
          %431 = vmatprep.subr.mxu0 0.0
          %432 = vmatpush1.msra.mxu0 0.0
          %433 = vmatprep.subr.mxu0 0.0
          %434 = vmatpush1.msra.mxu0 0.0
          %435 = vmatprep.subr.mxu0 0.0
          %436 = vmatpush1.msra.mxu0 0.0
          %437 = vmatprep.subr.mxu0 0.0
          %438 = vmatpush1.msra.mxu0 0.0
          %439 = vmatprep.subr.mxu0 0.0
          %440 = vmatpush1.msra.mxu0 0.0
          %441 = vmatprep.subr.mxu0 0.0
          %442 = vmatpush1.msra.mxu0 0.0
          %443 = vmatprep.subr.mxu0 0.0
          %444 = vmatpush1.msra.mxu0 0.0
          %445 = vmatprep.subr.mxu0 0.0
          %446 = vmatpush1.msra.mxu0 0.0
          %447 = vmatprep.subr.mxu0 0.0
          %448 = vmatpush1.msra.mxu0 0.0
          %449 = vmatprep.subr.mxu0 0.0
          %450 = vmatpush1.msra.mxu0 0.0
          %451 = vmatprep.subr.mxu0 0.0
          %452 = vmatpush1.msra.mxu0 0.0
          %453 = vmatprep.subr.mxu0 0.0
          %454 = vmatpush1.msra.mxu0 0.0
          %455 = vmatprep.subr.mxu0 0.0
          %456 = vmatpush1.msra.mxu0 %v418
          %457 = vmatprep.subr.mxu0 0.0
          %458 = vmatpush2.msra.mxu0 0.0
          %459 = vmatprep.subr.mxu0 0.0
          %460 = vmatpush2.msra.mxu0 0.0
          %461 = vmatprep.subr.mxu0 0.0
          %462 = vmatpush2.msra.mxu0 0.0
          %463 = vmatprep.subr.mxu0 0.0
          %464 = vmatpush2.msra.mxu0 0.0
          %465 = vmatprep.subr.mxu0 0.0
          %466 = vmatpush2.msra.mxu0 0.0
          %467 = vmatprep.subr.mxu0 0.0
          %468 = vmatpush2.msra.mxu0 0.0
          %469 = vmatprep.subr.mxu0 0.0
          %470 = vmatpush2.msra.mxu0 0.0
          %471 = vmatprep.subr.mxu0 0.0
          %472 = vmatpush2.msra.mxu0 0.0
          %473 = vmatprep.subr.mxu0 0.0
          %474 = vmatpush2.msra.mxu0 0.0
          %475 = vmatprep.subr.mxu0 0.0
          %476 = vmatpush2.msra.mxu0 0.0
          %477 = vmatprep.subr.mxu0 0.0
          %478 = vmatpush2.msra.mxu0 0.0
          %479 = vmatprep.subr.mxu0 0.0
          %480 = vmatpush2.msra.mxu0 0.0
          %481 = vmatprep.subr.mxu0 0.0
          %482 = vmatpush2.msra.mxu0 0.0
          %483 = vmatprep.subr.mxu0 0.0
          %484 = vmatpush2.msra.mxu0 0.0
          %485 = vmatprep.subr.mxu0 0.0
          %486 = vmatpush2.msra.mxu0 0.0
          %487 = vmatprep.subr.mxu0 0.0
          %488 = vmatpush2.msra.mxu0 0.0
          %489 = vmatprep.mubr.f32.mxu0 0.0
          %490 = vmatmul.mubr.f32.gmra.mxu0 %v420
          %v491 = vpop.f32.mrf.mxu0
          %v492 = vadd.f32 0.0, %v491
          %v493 = vpop.f32.mrf.mxu0
          %494 = vmatprep.mubr.f32.mxu0 0.0
          %495 = vmatmul.mubr.f32.gmra.mxu0 %v423
          %v496 = vpop.f32.mrf.mxu0
          %v497 = vadd.f32 0.0, %v496
          %v498 = vpop.f32.mrf.mxu0
          %499 = vdwg.mxu0
          %v500 = vadd.f32 %v404, %v492
          %v501 = vadd.f32 %v409, %v497
          %502 = vst.msk [vmem:[#allocation2] sm:$0xff] %vm244, %v500
          %503 = vst.msk [vmem:[#allocation2 + $0x8] sm:$0xff] %vm244, %v501
        $region40: #{mgconv_forward.1} parent=35 // pred_fallthru
          _
        %p504 = scmp.gt.s32.totalorder %s21, 0
        // Predicated region
        $region41: #{mgconv_forward.1} parent=35 // pred_check
          %p505 = pneg %p504
        $region42: #{mgconv_forward.1} parent=35 // pred_check_branch
          %507 = sbr.rel (%p505) target = $region44
        $region43: #{mgconv_forward.1} parent=35 // pred_region
          %v508 = vld [vmem:[#allocation2] sm:$0xff]
          %v509 = vld [vmem:[#allocation2 + $0x8] sm:$0xff]
          %v510 = vadd.f32 %v508, %v404
          %v511 = vadd.f32 %v509, %v409
          %512 = vst.msk [vmem:[#allocation2] sm:$0xff] %vm244, %v510
          %513 = vst.msk [vmem:[#allocation2 + $0x8] sm:$0xff] %vm244, %v511
        $region44: #{mgconv_forward.1} parent=35 // pred_fallthru
          _
        %p514 = scmp.eq.s32.totalorder %s21, 1
        // Predicated region
        $region45: #{mgconv_forward.1} parent=35 // pred_check
          %p515 = pneg %p514
        $region46: #{mgconv_forward.1} parent=35 // pred_check_branch
          %517 = sbr.rel (%p515) target = $region48
        $region47: #{mgconv_forward.1} parent=35 // pred_region
          %v518 = vld [vmem:[#allocation2] sm:$0xff]
          %v519 = vld [vmem:[#allocation2 + $0x8] sm:$0xff]
          %520 = vst.msk [vmem:[#allocation3] sm:$0xff] %vm244, %v518
          %521 = vst.msk [vmem:[#allocation3 + $0x8] sm:$0xff] %vm244, %v519
        $region48: #{mgconv_forward.1} parent=35 // pred_fallthru
          _
        // Predicated region
        $region49: #{mgconv_forward.1} parent=35 // pred_check
          %p522 = pneg %p142
        $region50: #{mgconv_forward.1} parent=35 // pred_check_branch
          %524 = sbr.rel (%p522) target = $region52
        $region51: #{mgconv_forward.1} parent=35 // pred_region
          %s525 = smul.u32 2, %s20
          %s527 = ssub.s32 256, 256
          %528 = vsyncadd [#allocation4], %s527
          %s529 = smul.addr %s525, 128
          %s530 = scalar_lea.hbm %s4, %s529
          %s531 = sshll.u32 [#allocation3], 4
          %s532 = int_to_ptr.vmem [resolvable:$true] %s531
          %537 = dma.vmem_to_hbm [thread:$0]  %s532, 256, %s530, [#allocation4], 128, 128, 8
        $region52: #{mgconv_forward.1} parent=35 // pred_fallthru
          _
        // Predicated region
        $region53: #{mgconv_forward.1} parent=35 // pred_check
          %p538 = pneg %p142
        $region54: #{mgconv_forward.1} parent=35 // pred_check_branch
          %540 = sbr.rel (%p538) target = $region56
        $region55: #{mgconv_forward.1} parent=35 // pred_region
          %541 = dma.done [#allocation4], 256
        $region56: #{mgconv_forward.1} parent=35 // pred_fallthru
          _
      $region36: #{mgconv_forward.1} parent=5 // pred_fallthru
        _
      %p542 = scmp.le.s32.totalorder 2, %s11
      // Predicated region
      $region57: #{mgconv_forward.1} parent=5 // pred_check
        %p543 = pneg %p542
      $region58: #{mgconv_forward.1} parent=5 // pred_check_branch
        %545 = sbr.rel (%p543) target = $region60
      $region59: #{mgconv_forward.1} parent=5 // pred_region
        %s546 = ssub.s32 %s11, 2
      $region60: #{mgconv_forward.1} parent=5 // pred_fallthru
        _
    $region6: #{mgconv_forward.1} parent=1 // loop_footer
      %s15 = sadd.s32 1, %s11
    $region7: #{mgconv_forward.1} parent=1 // loop_footer_branch
      %10 = sbr.rel target = $region3
    $region8: #{mgconv_forward.1} parent=1 // loop_exit
      _
    %547 = vsyncpa [#allocation4], 1
    %s548 = scalar_lea.sflag [#allocation4], 1
    %549 = vsyncpa %s548, 1

</llo_original>
